<compile_context>
chip_gen: v5e
topology: v5e:2x2
jax: 0.10.0
libtpu: 0.0.40
codegen_flags: <defaults>
</compile_context>

<pallas_src>
import jax
import jax.numpy as jnp
from jax.experimental import pallas as pl
from jax.experimental.pallas import tpu as pltpu

H1 = 256   # fcs1 out
H2 = 128   # fcs2 / fca1 / fc2 out


def _round_up(x, m):
    return (x + m - 1) // m * m


def _critic_kernel(state_ref, action_ref,
                   ws1_ref, bs1_ref,
                   ws2_ref, bs2_ref,
                   wa1_ref, ba1_ref,
                   w2_ref, b2_ref,
                   w3_ref, b3_ref,
                   out_ref):
    bf16 = jnp.bfloat16

    # s1 = relu(state @ Ws1 + bs1)                          -> (tb, 256)
    s1 = jnp.dot(state_ref[...].astype(bf16), ws1_ref[...],
                 preferred_element_type=jnp.float32) + bs1_ref[...]
    s1 = jnp.maximum(s1, 0.0)

    # s2 = relu(s1 @ Ws2 + bs2)                             -> (tb, 128)
    s2 = jnp.dot(s1.astype(bf16), ws2_ref[...],
                 preferred_element_type=jnp.float32) + bs2_ref[...]
    s2 = jnp.maximum(s2, 0.0)

    # a1 = relu(action @ Wa1 + ba1)                         -> (tb, 128)
    a1 = jnp.dot(action_ref[...].astype(bf16), wa1_ref[...],
                 preferred_element_type=jnp.float32) + ba1_ref[...]
    a1 = jnp.maximum(a1, 0.0)

    # x = relu(cat(s2, a1) @ W2 + b2)
    #   = relu(s2 @ W2[:128] + a1 @ W2[128:] + b2)          -> (tb, 128)
    # (static, tile-aligned slices of the resident VMEM ref: zero-cost views)
    x = (jnp.dot(s2.astype(bf16), w2_ref[:H2, :],
                 preferred_element_type=jnp.float32)
         + jnp.dot(a1.astype(bf16), w2_ref[H2:, :],
                   preferred_element_type=jnp.float32)
         + b2_ref[...])
    x = jnp.maximum(x, 0.0)

    # q = x @ W3 + b3  as a lane reduction (VPU mul + XLU sum; no 1-lane MXU pass)
    q = jnp.sum(x * w3_ref[...], axis=-1, keepdims=True) + b3_ref[...]

    # Lane-dense store: broadcast q across the 128-wide output slab (unmasked vst);
    # the wrapper slices column 0.
    out_ref[...] = jnp.broadcast_to(q, out_ref.shape).astype(out_ref.dtype)


def _prepare_params(params):
    """Cast weights to bf16, shape biases as broadcastable rows, w3 as a row."""
    (ws1, bs1, ws2, bs2, wa1, ba1, w2, b2, w3, b3) = params
    bf16, f32 = jnp.bfloat16, jnp.float32
    return (ws1.astype(bf16), bs1.reshape(1, -1).astype(f32),
            ws2.astype(bf16), bs2.reshape(1, -1).astype(f32),
            wa1.astype(bf16), ba1.reshape(1, -1).astype(f32),
            w2.astype(bf16),  b2.reshape(1, -1).astype(f32),
            w3.reshape(1, -1).astype(f32),      # (1, 128) row for the reduction
            b3.reshape(1, 1).astype(f32))


def critic_forward(state, action, params, *, tile_b=256):
    """Critic forward pass as a single batch-tiled Pallas TPU kernel."""
    B = state.shape[0]
    state = state.astype(jnp.float32)
    action = action.astype(jnp.float32)
    state_dim = state.shape[1]
    action_dim = action.shape[1]

    wargs = _prepare_params(params)

    # Batch tile: multiple of 8 sublanes, capped at tile_b; pad B up to it.
    tb = _round_up(min(tile_b, _round_up(B, 8)), 8)
    padded_B = _round_up(B, tb)
    if padded_B != B:
        state = jnp.pad(state, ((0, padded_B - B), (0, 0)))
        action = jnp.pad(action, ((0, padded_B - B), (0, 0)))
    grid = (padded_B // tb,)

    def batch_spec(feat):
        return pl.BlockSpec((tb, feat), lambda i: (i, 0))

    def resident_spec(arr):          # weights/biases: constant index -> VMEM resident
        return pl.BlockSpec(arr.shape, lambda i: (0, 0))

    in_specs = ([batch_spec(state_dim), batch_spec(action_dim)]
                + [resident_spec(a) for a in wargs])
    out_specs = pl.BlockSpec((tb, H2), lambda i: (i, 0))

    flops = 2 * padded_B * (state_dim * H1 + H1 * H2 + action_dim * H2
                            + 2 * H2 * H2 + H2)
    bytes_accessed = (sum(int(a.size) * a.dtype.itemsize for a in wargs)
                      + padded_B * (state_dim + action_dim) * 4
                      + padded_B * H2 * 4)

    out = pl.pallas_call(
        _critic_kernel,
        out_shape=jax.ShapeDtypeStruct((padded_B, H2), jnp.float32),
        grid=grid,
        in_specs=in_specs,
        out_specs=out_specs,
        compiler_params=pltpu.CompilerParams(
            dimension_semantics=("parallel",)),
        cost_estimate=pl.CostEstimate(flops=flops, transcendentals=0,
                                      bytes_accessed=bytes_accessed),
    )(state, action, *wargs)

    return out[:B, :1]


def init_critic_params(key, state_dim, action_dim):
    """Deterministic init matching nn.Linear default: U(-1/sqrt(fan_in), +1/sqrt(fan_in))."""
    def linear(k, fan_in, fan_out):
        kw, kb = jax.random.split(k)
        bound = 1.0 / jnp.sqrt(fan_in)
        w = jax.random.uniform(kw, (fan_in, fan_out), jnp.float32, -bound, bound)
        b = jax.random.uniform(kb, (fan_out,), jnp.float32, -bound, bound)
        return w, b

    k1, k2, k3, k4, k5 = jax.random.split(key, 5)
    ws1, bs1 = linear(k1, state_dim, H1)     # fcs1: state_dim -> 256
    ws2, bs2 = linear(k2, H1, H2)            # fcs2: 256 -> 128
    wa1, ba1 = linear(k3, action_dim, H2)    # fca1: action_dim -> 128
    w2,  b2  = linear(k4, 2 * H2, H2)        # fc2 : 256 -> 128
    w3,  b3  = linear(k5, H2, 1)             # fc3 : 128 -> 1
    return (ws1, bs1, ws2, bs2, wa1, ba1, w2, b2, w3, b3)


def critic_reference_f32(state, action, params):
    """Pure-JAX f32 reference with original PyTorch semantics."""
    (ws1, bs1, ws2, bs2, wa1, ba1, w2, b2, w3, b3) = params
    s1 = jax.nn.relu(state @ ws1 + bs1)
    s2 = jax.nn.relu(s1 @ ws2 + bs2)
    a1 = jax.nn.relu(action @ wa1 + ba1)
    x = jnp.concatenate([s2, a1], axis=1)
    x = jax.nn.relu(x @ w2 + b2)
    return x @ w3 + b3


def critic_reference_matched(state, action, kargs):
    """Pure-JAX reference with the same bf16-weight / f32-accumulate precision."""
    (ws1, bs1, ws2, bs2, wa1, ba1, w2, b2, w3_row, b3) = kargs
    bf16, f32 = jnp.bfloat16, jnp.float32
    s1 = jax.nn.relu(jnp.dot(state.astype(bf16), ws1,
                             preferred_element_type=f32) + bs1)
    s2 = jax.nn.relu(jnp.dot(s1.astype(bf16), ws2,
                             preferred_element_type=f32) + bs2)
    a1 = jax.nn.relu(jnp.dot(action.astype(bf16), wa1,
                             preferred_element_type=f32) + ba1)
    x = jax.nn.relu(jnp.dot(s2.astype(bf16), w2[:H2],
                            preferred_element_type=f32)
                    + jnp.dot(a1.astype(bf16), w2[H2:],
                              preferred_element_type=f32) + b2)
    return jnp.sum(x * w3_row, axis=-1, keepdims=True) + b3


if __name__ == "__main__":
    state_dim, action_dim, batch = 8, 4, 2

    key = jax.random.PRNGKey(0)
    kp, ks, ka = jax.random.split(key, 3)

    params = init_critic_params(kp, state_dim, action_dim)
    state = jax.random.normal(ks, (batch, state_dim), jnp.float32)
    action = jax.random.normal(ka, (batch, action_dim), jnp.float32)

    q = critic_forward(state, action, params)
    jax.block_until_ready(q)
    assert q.shape == (batch, 1)

    # Tight check vs a precision-matched (bf16-weight) reference.
    q_matched = critic_reference_matched(state, action, _prepare_params(params))
    assert jnp.allclose(q, q_matched, atol=1e-3, rtol=1e-3), (q, q_matched)

    # Loose check vs the full-f32 PyTorch-semantics reference (bf16 weight quantization).
    q_f32 = critic_reference_f32(state, action, params)
    assert jnp.allclose(q, q_f32, atol=5e-2, rtol=5e-2), (q, q_f32)

    print("KERNEL_OK")
</pallas_src>

<mosaic_0001>
module attributes {stable_mosaic.version = 11 : i64} {
  func.func @_critic_kernel(%arg0: i32, %arg1: memref<8x8xf32, #tpu.memory_space<vmem>>, %arg2: memref<8x4xf32, #tpu.memory_space<vmem>>, %arg3: memref<8x256xbf16, #tpu.memory_space<vmem>>, %arg4: memref<1x256xf32, #tpu.memory_space<vmem>>, %arg5: memref<256x128xbf16, #tpu.memory_space<vmem>>, %arg6: memref<1x128xf32, #tpu.memory_space<vmem>>, %arg7: memref<4x128xbf16, #tpu.memory_space<vmem>>, %arg8: memref<1x128xf32, #tpu.memory_space<vmem>>, %arg9: memref<256x128xbf16, #tpu.memory_space<vmem>>, %arg10: memref<1x128xf32, #tpu.memory_space<vmem>>, %arg11: memref<1x128xf32, #tpu.memory_space<vmem>>, %arg12: memref<1x1xf32, #tpu.memory_space<vmem>>, %arg13: memref<8x128xf32, #tpu.memory_space<vmem>>) attributes {dimension_semantics = [#tpu.dimension_semantics<parallel>], iteration_bounds = array<i64: 1>, scalar_prefetch = 0 : i64, scratch_operands = 0 : i64, tpu.core_type = #tpu.core_type<tc>, window_params = [{transform_indices = @transform_0, window_bounds = array<i64: 8, 8>}, {transform_indices = @transform_1, window_bounds = array<i64: 8, 4>}, {pipeline_mode = #tpu.pipeline_mode<synchronous>, transform_indices = @transform_2, window_bounds = array<i64: 8, 256>}, {pipeline_mode = #tpu.pipeline_mode<synchronous>, transform_indices = @transform_3, window_bounds = array<i64: 1, 256>}, {pipeline_mode = #tpu.pipeline_mode<synchronous>, transform_indices = @transform_4, window_bounds = array<i64: 256, 128>}, {pipeline_mode = #tpu.pipeline_mode<synchronous>, transform_indices = @transform_5, window_bounds = array<i64: 1, 128>}, {pipeline_mode = #tpu.pipeline_mode<synchronous>, transform_indices = @transform_6, window_bounds = array<i64: 4, 128>}, {pipeline_mode = #tpu.pipeline_mode<synchronous>, transform_indices = @transform_7, window_bounds = array<i64: 1, 128>}, {pipeline_mode = #tpu.pipeline_mode<synchronous>, transform_indices = @transform_8, window_bounds = array<i64: 256, 128>}, {pipeline_mode = #tpu.pipeline_mode<synchronous>, transform_indices = @transform_9, window_bounds = array<i64: 1, 128>}, {pipeline_mode = #tpu.pipeline_mode<synchronous>, transform_indices = @transform_10, window_bounds = array<i64: 1, 128>}, {pipeline_mode = #tpu.pipeline_mode<synchronous>, transform_indices = @transform_11, window_bounds = array<i64: 1, 1>}, {transform_indices = @transform_12, window_bounds = array<i64: 8, 128>}]} {
    %c0 = arith.constant 0 : index
    %c0_0 = arith.constant 0 : index
    %0 = vector.load %arg1[%c0, %c0_0] : memref<8x8xf32, #tpu.memory_space<vmem>>, vector<8x8xf32>
    %1 = arith.truncf %0 : vector<8x8xf32> to vector<8x8xbf16>
    %c0_1 = arith.constant 0 : index
    %c0_2 = arith.constant 0 : index
    %2 = vector.load %arg3[%c0_1, %c0_2] : memref<8x256xbf16, #tpu.memory_space<vmem>>, vector<8x256xbf16>
    %cst = arith.constant dense<0.000000e+00> : vector<8x256xf32>
    %3 = tpu.matmul %1, %2, %cst {dimension_numbers = #tpu.dot_dimension_numbers<[1], [0], [0], [1], [0, 0, 1, 1], [], []>} : vector<8x8xbf16>, vector<8x256xbf16>, vector<8x256xf32> -> vector<8x256xf32>
    %c0_3 = arith.constant 0 : index
    %c0_4 = arith.constant 0 : index
    %4 = vector.load %arg4[%c0_3, %c0_4] : memref<1x256xf32, #tpu.memory_space<vmem>>, vector<1x256xf32>
    %5 = vector.broadcast %4 : vector<1x256xf32> to vector<8x256xf32>
    %6 = arith.addf %3, %5 : vector<8x256xf32>
    %cst_5 = arith.constant 0.000000e+00 : f32
    %7 = vector.broadcast %cst_5 : f32 to vector<8x256xf32>
    %8 = arith.maximumf %6, %7 : vector<8x256xf32>
    %9 = arith.truncf %8 : vector<8x256xf32> to vector<8x256xbf16>
    %c0_6 = arith.constant 0 : index
    %c0_7 = arith.constant 0 : index
    %10 = vector.load %arg5[%c0_6, %c0_7] : memref<256x128xbf16, #tpu.memory_space<vmem>>, vector<256x128xbf16>
    %cst_8 = arith.constant dense<0.000000e+00> : vector<8x128xf32>
    %11 = tpu.matmul %9, %10, %cst_8 {dimension_numbers = #tpu.dot_dimension_numbers<[1], [0], [0], [1], [0, 0, 1, 1], [], []>} : vector<8x256xbf16>, vector<256x128xbf16>, vector<8x128xf32> -> vector<8x128xf32>
    %c0_9 = arith.constant 0 : index
    %c0_10 = arith.constant 0 : index
    %12 = vector.load %arg6[%c0_9, %c0_10] : memref<1x128xf32, #tpu.memory_space<vmem>>, vector<1x128xf32>
    %13 = vector.broadcast %12 : vector<1x128xf32> to vector<8x128xf32>
    %14 = arith.addf %11, %13 : vector<8x128xf32>
    %cst_11 = arith.constant 0.000000e+00 : f32
    %15 = vector.broadcast %cst_11 : f32 to vector<8x128xf32>
    %16 = arith.maximumf %14, %15 : vector<8x128xf32>
    %c0_12 = arith.constant 0 : index
    %c0_13 = arith.constant 0 : index
    %17 = vector.load %arg2[%c0_12, %c0_13] : memref<8x4xf32, #tpu.memory_space<vmem>>, vector<8x4xf32>
    %18 = arith.truncf %17 : vector<8x4xf32> to vector<8x4xbf16>
    %c0_14 = arith.constant 0 : index
    %c0_15 = arith.constant 0 : index
    %19 = vector.load %arg7[%c0_14, %c0_15] : memref<4x128xbf16, #tpu.memory_space<vmem>>, vector<4x128xbf16>
    %cst_16 = arith.constant dense<0.000000e+00> : vector<8x128xf32>
    %20 = tpu.matmul %18, %19, %cst_16 {dimension_numbers = #tpu.dot_dimension_numbers<[1], [0], [0], [1], [0, 0, 1, 1], [], []>} : vector<8x4xbf16>, vector<4x128xbf16>, vector<8x128xf32> -> vector<8x128xf32>
    %c0_17 = arith.constant 0 : index
    %c0_18 = arith.constant 0 : index
    %21 = vector.load %arg8[%c0_17, %c0_18] : memref<1x128xf32, #tpu.memory_space<vmem>>, vector<1x128xf32>
    %22 = vector.broadcast %21 : vector<1x128xf32> to vector<8x128xf32>
    %23 = arith.addf %20, %22 : vector<8x128xf32>
    %cst_19 = arith.constant 0.000000e+00 : f32
    %24 = vector.broadcast %cst_19 : f32 to vector<8x128xf32>
    %25 = arith.maximumf %23, %24 : vector<8x128xf32>
    %26 = arith.truncf %16 : vector<8x128xf32> to vector<8x128xbf16>
    %c0_20 = arith.constant 0 : index
    %c0_21 = arith.constant 0 : index
    %27 = vector.load %arg9[%c0_20, %c0_21] : memref<256x128xbf16, #tpu.memory_space<vmem>>, vector<128x128xbf16>
    %cst_22 = arith.constant dense<0.000000e+00> : vector<8x128xf32>
    %28 = tpu.matmul %26, %27, %cst_22 {dimension_numbers = #tpu.dot_dimension_numbers<[1], [0], [0], [1], [0, 0, 1, 1], [], []>} : vector<8x128xbf16>, vector<128x128xbf16>, vector<8x128xf32> -> vector<8x128xf32>
    %29 = arith.truncf %25 : vector<8x128xf32> to vector<8x128xbf16>
    %c128 = arith.constant 128 : index
    %c0_23 = arith.constant 0 : index
    %30 = vector.load %arg9[%c128, %c0_23] : memref<256x128xbf16, #tpu.memory_space<vmem>>, vector<128x128xbf16>
    %cst_24 = arith.constant dense<0.000000e+00> : vector<8x128xf32>
    %31 = tpu.matmul %29, %30, %cst_24 {dimension_numbers = #tpu.dot_dimension_numbers<[1], [0], [0], [1], [0, 0, 1, 1], [], []>} : vector<8x128xbf16>, vector<128x128xbf16>, vector<8x128xf32> -> vector<8x128xf32>
    %32 = arith.addf %28, %31 : vector<8x128xf32>
    %c0_25 = arith.constant 0 : index
    %c0_26 = arith.constant 0 : index
    %33 = vector.load %arg10[%c0_25, %c0_26] : memref<1x128xf32, #tpu.memory_space<vmem>>, vector<1x128xf32>
    %34 = vector.broadcast %33 : vector<1x128xf32> to vector<8x128xf32>
    %35 = arith.addf %32, %34 : vector<8x128xf32>
    %cst_27 = arith.constant 0.000000e+00 : f32
    %36 = vector.broadcast %cst_27 : f32 to vector<8x128xf32>
    %37 = arith.maximumf %35, %36 : vector<8x128xf32>
    %c0_28 = arith.constant 0 : index
    %c0_29 = arith.constant 0 : index
    %38 = vector.load %arg11[%c0_28, %c0_29] : memref<1x128xf32, #tpu.memory_space<vmem>>, vector<1x128xf32>
    %39 = vector.broadcast %38 : vector<1x128xf32> to vector<8x128xf32>
    %40 = arith.mulf %37, %39 : vector<8x128xf32>
    %cst_30 = arith.constant dense<0.000000e+00> : vector<8xf32>
    %41 = vector.multi_reduction <add>, %40, %cst_30 [1] : vector<8x128xf32> to vector<8xf32>
    %42 = vector.shape_cast %41 : vector<8xf32> to vector<8x1xf32>
    %c0_31 = arith.constant 0 : index
    %c0_32 = arith.constant 0 : index
    %43 = vector.load %arg12[%c0_31, %c0_32] : memref<1x1xf32, #tpu.memory_space<vmem>>, vector<1x1xf32>
    %44 = vector.broadcast %43 : vector<1x1xf32> to vector<8x1xf32>
    %45 = arith.addf %42, %44 : vector<8x1xf32>
    %46 = vector.shape_cast %45 : vector<8x1xf32> to vector<8x1xf32>
    %47 = vector.broadcast %46 : vector<8x1xf32> to vector<8x128xf32>
    %c0_33 = arith.constant 0 : index
    %c0_34 = arith.constant 0 : index
    %48 = vector.load %arg13[%c0_33, %c0_34] : memref<8x128xf32, #tpu.memory_space<vmem>>, vector<8x128xf32>
    tpu.vector_store %arg13[%c0_33, %c0_34], %47 {strides = array<i32>} : memref<8x128xf32, #tpu.memory_space<vmem>>, vector<8x128xf32>,
    return
  }
  func.func @transform_0(%arg0: i32) -> (i32, i32) {
    %c0_i32 = arith.constant 0 : i32
    %c0_i32_0 = arith.constant 0 : i32
    return %arg0, %c0_i32 : i32, i32
  }
  func.func @transform_1(%arg0: i32) -> (i32, i32) {
    %c0_i32 = arith.constant 0 : i32
    %c0_i32_0 = arith.constant 0 : i32
    return %arg0, %c0_i32 : i32, i32
  }
  func.func @transform_2(%arg0: i32) -> (i32, i32) {
    %c0_i32 = arith.constant 0 : i32
    %c0_i32_0 = arith.constant 0 : i32
    %c0_i32_1 = arith.constant 0 : i32
    return %c0_i32, %c0_i32_0 : i32, i32
  }
  func.func @transform_3(%arg0: i32) -> (i32, i32) {
    %c0_i32 = arith.constant 0 : i32
    %c0_i32_0 = arith.constant 0 : i32
    %c0_i32_1 = arith.constant 0 : i32
    return %c0_i32, %c0_i32_0 : i32, i32
  }
  func.func @transform_4(%arg0: i32) -> (i32, i32) {
    %c0_i32 = arith.constant 0 : i32
    %c0_i32_0 = arith.constant 0 : i32
    %c0_i32_1 = arith.constant 0 : i32
    return %c0_i32, %c0_i32_0 : i32, i32
  }
  func.func @transform_5(%arg0: i32) -> (i32, i32) {
    %c0_i32 = arith.constant 0 : i32
    %c0_i32_0 = arith.constant 0 : i32
    %c0_i32_1 = arith.constant 0 : i32
    return %c0_i32, %c0_i32_0 : i32, i32
  }
  func.func @transform_6(%arg0: i32) -> (i32, i32) {
    %c0_i32 = arith.constant 0 : i32
    %c0_i32_0 = arith.constant 0 : i32
    %c0_i32_1 = arith.constant 0 : i32
    return %c0_i32, %c0_i32_0 : i32, i32
  }
  func.func @transform_7(%arg0: i32) -> (i32, i32) {
    %c0_i32 = arith.constant 0 : i32
    %c0_i32_0 = arith.constant 0 : i32
    %c0_i32_1 = arith.constant 0 : i32
    return %c0_i32, %c0_i32_0 : i32, i32
  }
  func.func @transform_8(%arg0: i32) -> (i32, i32) {
    %c0_i32 = arith.constant 0 : i32
    %c0_i32_0 = arith.constant 0 : i32
    %c0_i32_1 = arith.constant 0 : i32
    return %c0_i32, %c0_i32_0 : i32, i32
  }
  func.func @transform_9(%arg0: i32) -> (i32, i32) {
    %c0_i32 = arith.constant 0 : i32
    %c0_i32_0 = arith.constant 0 : i32
    %c0_i32_1 = arith.constant 0 : i32
    return %c0_i32, %c0_i32_0 : i32, i32
  }
  func.func @transform_10(%arg0: i32) -> (i32, i32) {
    %c0_i32 = arith.constant 0 : i32
    %c0_i32_0 = arith.constant 0 : i32
    %c0_i32_1 = arith.constant 0 : i32
    return %c0_i32, %c0_i32_0 : i32, i32
  }
  func.func @transform_11(%arg0: i32) -> (i32, i32) {
    %c0_i32 = arith.constant 0 : i32
    %c0_i32_0 = arith.constant 0 : i32
    %c0_i32_1 = arith.constant 0 : i32
    return %c0_i32, %c0_i32_0 : i32, i32
  }
  func.func @transform_12(%arg0: i32) -> (i32, i32) {
    %c0_i32 = arith.constant 0 : i32
    %c0_i32_0 = arith.constant 0 : i32
    return %arg0, %c0_i32 : i32, i32
  }
}

</mosaic_0001>

<llo_original>
// kernel: tpu_custom_call.1
$region0: #{tpu_custom_call.1}
  #allocation0 [shape = 'u32[]', space=smem, size = 0x4, offset = 0x4, fixed_abs, tag = 'smem constant byte address 0x4 - core index']
  #allocation1 [shape = 'u32[72,128]{1,0:T(1,128)}', space=vmem, size = 0x9000, scoped, tag = 'internal scratch']
  #allocation2 [shape = 'f32[1,1]{1,0:T(1,128)S(1)}', space=vmem, size = 0x200, scoped, tag = 'scoped memory for tpu_custom_call.1']
  %s0 = inlined_call_operand.vmem [shape: f32[8,8], index: 0, kind: input, shape index: {}]
  %s1 = inlined_call_operand.vmem [shape: f32[8,4], index: 1, kind: input, shape index: {}]
  %s2 = inlined_call_operand.hbm [shape: bf16[8,256], index: 2, kind: input, shape index: {}]
  %s3 = inlined_call_operand.vmem [shape: f32[1,256], index: 3, kind: input, shape index: {}]
  %s4 = inlined_call_operand.hbm [shape: bf16[256,128], index: 4, kind: input, shape index: {}]
  %s5 = inlined_call_operand.vmem [shape: f32[1,128], index: 5, kind: input, shape index: {}]
  %s6 = inlined_call_operand.vmem [shape: bf16[4,128], index: 6, kind: input, shape index: {}]
  %s7 = inlined_call_operand.vmem [shape: f32[1,128], index: 7, kind: input, shape index: {}]
  %s8 = inlined_call_operand.hbm [shape: bf16[256,128], index: 8, kind: input, shape index: {}]
  %s9 = inlined_call_operand.vmem [shape: f32[1,128], index: 9, kind: input, shape index: {}]
  %s10 = inlined_call_operand.vmem [shape: f32[1,128], index: 10, kind: input, shape index: {}]
  %s11 = inlined_call_operand.<no memory space> [shape: f32[1,1], index: 11, kind: input, shape index: {}]
  %s12 = inlined_call_operand.hbm [shape: f32[8,128], index: 12, kind: output, shape index: {}]
  %s13 = sld [smem:[#allocation0]]
  $region70: #{tpu_custom_call.1} parent=0
    _
  %s15 = ssub.s32 1, %s13
  %s16 = scalar_select 0, %s15, %s13
  %v17 = vstv %s11
  %18 = vst [vmem:[#allocation2] sm:$0x1] %v17
  $region1: #{tpu_custom_call.1} parent=0
    #allocation3 [shape = 'u8[4096]{0}', space=vmem, size = 0x1000, scoped, tag = 'input window, operand 2, single buffered']
    #allocation4 [shape = 's32[1]{0}', space=sflag, size = 0x4, scoped, tag = 'scoped memory for tpu_custom_call.1']
    #allocation5 [shape = 's32[1]{0}', space=sflag, size = 0x4, scoped, tag = 'scoped memory for tpu_custom_call.1']
    #allocation6 [shape = 'u8[65536]{0}', space=vmem, size = 0x10000, scoped, tag = 'input window, operand 4, single buffered']
    #allocation7 [shape = 's32[1]{0}', space=sflag, size = 0x4, scoped, tag = 'scoped memory for tpu_custom_call.1']
    #allocation8 [shape = 'u8[65536]{0}', space=vmem, size = 0x10000, scoped, tag = 'input window, operand 8, single buffered']
    #allocation9 [shape = 'u8[4096]{0}', space=vmem, size = 0x1000, scoped, tag = 'output window, operand 0, single buffered']
    %19 = vsyncpa [#allocation4], 0
    %20 = vsyncpa [#allocation7], 0
    %21 = vsyncpa [#allocation5], 0
    // Predicated region
    $region2: #{tpu_custom_call.1} parent=1 // pred_check
      _
    $region3: #{tpu_custom_call.1} parent=1 // pred_check_branch
      %23 = sbr.rel (0) target = $region5
    $region4: #{tpu_custom_call.1} parent=1 // pred_region
      _
    $region5: #{tpu_custom_call.1} parent=1 // pred_fallthru
      _
    // Predicated region
    $region6: #{tpu_custom_call.1} parent=1 // pred_check
      _
    $region7: #{tpu_custom_call.1} parent=1 // pred_check_branch
      %25 = sbr.rel (0) target = $region9
    $region8: #{tpu_custom_call.1} parent=1 // pred_region
      _
    $region9: #{tpu_custom_call.1} parent=1 // pred_fallthru
      _
    // Predicated region
    $region10: #{tpu_custom_call.1} parent=1 // pred_check
      _
    $region11: #{tpu_custom_call.1} parent=1 // pred_check_branch
      %27 = sbr.rel (0) target = $region13
    $region12: #{tpu_custom_call.1} parent=1 // pred_region
      %29 = vsyncadd [#allocation4], 0
      %s31 = sshll.u32 %s2, 4
      %s32 = int_to_ptr.hbm [resolvable:$true] %s31
      %s33 = sshll.u32 [#allocation3], 4
      %s34 = int_to_ptr.vmem [resolvable:$true] %s33
      %36 = dma.hbm_to_vmem [thread:$0]  %s32, 128, %s34, [#allocation4]
    $region13: #{tpu_custom_call.1} parent=1 // pred_fallthru
      _
    // Predicated region
    $region14: #{tpu_custom_call.1} parent=1 // pred_check
      _
    $region15: #{tpu_custom_call.1} parent=1 // pred_check_branch
      %38 = sbr.rel (0) target = $region17
    $region16: #{tpu_custom_call.1} parent=1 // pred_region
      _
    $region17: #{tpu_custom_call.1} parent=1 // pred_fallthru
      _
    // Predicated region
    $region18: #{tpu_custom_call.1} parent=1 // pred_check
      _
    $region19: #{tpu_custom_call.1} parent=1 // pred_check_branch
      %40 = sbr.rel (0) target = $region21
    $region20: #{tpu_custom_call.1} parent=1 // pred_region
      %42 = vsyncadd [#allocation7], 0
      %s43 = sshll.u32 %s4, 4
      %s44 = int_to_ptr.hbm [resolvable:$true] %s43
      %s45 = sshll.u32 [#allocation6], 4
      %s46 = int_to_ptr.vmem [resolvable:$true] %s45
      %51 = dma.hbm_to_vmem [thread:$0]  %s44, 2048, %s46, [#allocation7], 64, 64, 4
    $region21: #{tpu_custom_call.1} parent=1 // pred_fallthru
      _
    // Predicated region
    $region22: #{tpu_custom_call.1} parent=1 // pred_check
      _
    $region23: #{tpu_custom_call.1} parent=1 // pred_check_branch
      %53 = sbr.rel (0) target = $region25
    $region24: #{tpu_custom_call.1} parent=1 // pred_region
      _
    $region25: #{tpu_custom_call.1} parent=1 // pred_fallthru
      _
    // Predicated region
    $region26: #{tpu_custom_call.1} parent=1 // pred_check
      _
    $region27: #{tpu_custom_call.1} parent=1 // pred_check_branch
      %55 = sbr.rel (0) target = $region29
    $region28: #{tpu_custom_call.1} parent=1 // pred_region
      _
    $region29: #{tpu_custom_call.1} parent=1 // pred_fallthru
      _
    // Predicated region
    $region30: #{tpu_custom_call.1} parent=1 // pred_check
      _
    $region31: #{tpu_custom_call.1} parent=1 // pred_check_branch
      %57 = sbr.rel (0) target = $region33
    $region32: #{tpu_custom_call.1} parent=1 // pred_region
      _
    $region33: #{tpu_custom_call.1} parent=1 // pred_fallthru
      _
    // Predicated region
    $region34: #{tpu_custom_call.1} parent=1 // pred_check
      _
    $region35: #{tpu_custom_call.1} parent=1 // pred_check_branch
      %59 = sbr.rel (0) target = $region37
    $region36: #{tpu_custom_call.1} parent=1 // pred_region
      %61 = vsyncadd [#allocation7], 0
      %s62 = sshll.u32 %s8, 4
      %s63 = int_to_ptr.hbm [resolvable:$true] %s62
      %s64 = sshll.u32 [#allocation8], 4
      %s65 = int_to_ptr.vmem [resolvable:$true] %s64
      %70 = dma.hbm_to_vmem [thread:$0]  %s63, 2048, %s65, [#allocation7], 64, 64, 4
    $region37: #{tpu_custom_call.1} parent=1 // pred_fallthru
      _
    // Predicated region
    $region38: #{tpu_custom_call.1} parent=1 // pred_check
      _
    $region39: #{tpu_custom_call.1} parent=1 // pred_check_branch
      %72 = sbr.rel (0) target = $region41
    $region40: #{tpu_custom_call.1} parent=1 // pred_region
      _
    $region41: #{tpu_custom_call.1} parent=1 // pred_fallthru
      _
    // Predicated region
    $region42: #{tpu_custom_call.1} parent=1 // pred_check
      _
    $region43: #{tpu_custom_call.1} parent=1 // pred_check_branch
      %74 = sbr.rel (0) target = $region45
    $region44: #{tpu_custom_call.1} parent=1 // pred_region
      _
    $region45: #{tpu_custom_call.1} parent=1 // pred_fallthru
      _
    // Predicated region
    $region46: #{tpu_custom_call.1} parent=1 // pred_check
      _
    $region47: #{tpu_custom_call.1} parent=1 // pred_check_branch
      %76 = sbr.rel (0) target = $region49
    $region48: #{tpu_custom_call.1} parent=1 // pred_region
      _
    $region49: #{tpu_custom_call.1} parent=1 // pred_fallthru
      _
    // Predicated region
    $region50: #{tpu_custom_call.1} parent=1 // pred_check
      _
    $region51: #{tpu_custom_call.1} parent=1 // pred_check_branch
      %78 = sbr.rel (0) target = $region53
    $region52: #{tpu_custom_call.1} parent=1 // pred_region
      %80 = dma.done [#allocation4], 128
    $region53: #{tpu_custom_call.1} parent=1 // pred_fallthru
      _
    // Predicated region
    $region54: #{tpu_custom_call.1} parent=1 // pred_check
      _
    $region55: #{tpu_custom_call.1} parent=1 // pred_check_branch
      %82 = sbr.rel (0) target = $region57
    $region56: #{tpu_custom_call.1} parent=1 // pred_region
      %84 = dma.done [#allocation7], 2048
    $region57: #{tpu_custom_call.1} parent=1 // pred_fallthru
      _
    // Predicated region
    $region58: #{tpu_custom_call.1} parent=1 // pred_check
      _
    $region59: #{tpu_custom_call.1} parent=1 // pred_check_branch
      %86 = sbr.rel (0) target = $region61
    $region60: #{tpu_custom_call.1} parent=1 // pred_region
      %88 = dma.done [#allocation7], 2048
    $region61: #{tpu_custom_call.1} parent=1 // pred_fallthru
      _
    %v90 = vld [vmem:[%s0] sm:$0xff]
    %v91 = vpack.c.bf16 %v90, %v90
    %v92 = vld [vmem:[#allocation3] sm:$0xff]
    %v93 = vld [vmem:[%s3] sm:$0x3]
    %v95 = vperm.slane %v93, 0
    %v96 = vperm.slane %v93, 1
    %v100 = vunpack.c.l.b16 %v92
    %v101 = vunpack.c.h.b16 %v92
    %v102 = vpack.c.b16 %v100, %v100
    %v103 = vpack.c.b16 %v101, %v101
    %vm104 = vcmask 64512
    %v106 = vsel %vm104, %v91, 0
    %vm108 = vcmask 1043456
    %v110 = vsel %vm108, %v102, 0
    %v113 = vsel %vm108, %v103, 0
    %115 = vmatpush.bf16.msra.mxu0 0
    %116 = vmatpush.bf16.msra.mxu0 0
    %117 = vmatpush.bf16.msra.mxu0 0
    %118 = vmatpush.bf16.msra.mxu0 0
    %119 = vmatpush.bf16.msra.mxu0 0
    %120 = vmatpush.bf16.msra.mxu0 0
    %121 = vmatpush.bf16.msra.mxu0 0
    %122 = vmatpush.bf16.msra.mxu0 %v110
    %123 = vmatmul.bf16.gmra.mxu0 %v106
    %v124 = vpop.f32.mrf.mxu0
    %v125 = vadd.f32 %v95, %v124
    %v126 = vpop.f32.mrf.mxu0
    %127 = vdwg.mxu0
    %128 = vmatpush.bf16.msra.mxu0 0
    %129 = vmatpush.bf16.msra.mxu0 0
    %130 = vmatpush.bf16.msra.mxu0 0
    %131 = vmatpush.bf16.msra.mxu0 0
    %132 = vmatpush.bf16.msra.mxu0 0
    %133 = vmatpush.bf16.msra.mxu0 0
    %134 = vmatpush.bf16.msra.mxu0 0
    %135 = vmatpush.bf16.msra.mxu0 %v113
    %136 = vmatmul.bf16.gmra.mxu0 %v106
    %v137 = vpop.f32.mrf.mxu0
    %v138 = vadd.f32 %v96, %v137
    %v139 = vpop.f32.mrf.mxu0
    %140 = vdwg.mxu0
    %v141 = vmax.f32 %v125, 0.0
    %v142 = vmax.f32 %v138, 0.0
    %v143 = vpack.c.bf16 %v141, %v141
    %v144 = vpack.c.bf16 %v142, %v142
    %v145 = vld [vmem:[#allocation6] sm:$0xf]
    %v146 = vld [vmem:[#allocation6 + $0x4] sm:$0xf]
    %v147 = vld [vmem:[#allocation6 + $0x8] sm:$0xf]
    %v148 = vld [vmem:[#allocation6 + $0xc] sm:$0xf]
    %v149 = vld [vmem:[#allocation6 + $0x10] sm:$0xf]
    %v150 = vld [vmem:[#allocation6 + $0x14] sm:$0xf]
    %v151 = vld [vmem:[#allocation6 + $0x18] sm:$0xf]
    %v152 = vld [vmem:[#allocation6 + $0x1c] sm:$0xf]
    %v153 = vld [vmem:[#allocation6 + $0x20] sm:$0xf]
    %v154 = vld [vmem:[#allocation6 + $0x24] sm:$0xf]
    %v155 = vld [vmem:[#allocation6 + $0x28] sm:$0xf]
    %v156 = vld [vmem:[#allocation6 + $0x2c] sm:$0xf]
    %v157 = vld [vmem:[#allocation6 + $0x30] sm:$0xf]
    %v158 = vld [vmem:[#allocation6 + $0x34] sm:$0xf]
    %v159 = vld [vmem:[#allocation6 + $0x38] sm:$0xf]
    %v160 = vld [vmem:[#allocation6 + $0x3c] sm:$0xf]
    %v161 = vld [vmem:[#allocation6 + $0x40] sm:$0xf]
    %v162 = vld [vmem:[#allocation6 + $0x44] sm:$0xf]
    %v163 = vld [vmem:[#allocation6 + $0x48] sm:$0xf]
    %v164 = vld [vmem:[#allocation6 + $0x4c] sm:$0xf]
    %v165 = vld [vmem:[#allocation6 + $0x50] sm:$0xf]
    %v166 = vld [vmem:[#allocation6 + $0x54] sm:$0xf]
    %v167 = vld [vmem:[#allocation6 + $0x58] sm:$0xf]
    %v168 = vld [vmem:[#allocation6 + $0x5c] sm:$0xf]
    %v169 = vld [vmem:[#allocation6 + $0x60] sm:$0xf]
    %v170 = vld [vmem:[#allocation6 + $0x64] sm:$0xf]
    %v171 = vld [vmem:[#allocation6 + $0x68] sm:$0xf]
    %v172 = vld [vmem:[#allocation6 + $0x6c] sm:$0xf]
    %v173 = vld [vmem:[#allocation6 + $0x70] sm:$0xf]
    %v174 = vld [vmem:[#allocation6 + $0x74] sm:$0xf]
    %v175 = vld [vmem:[#allocation6 + $0x78] sm:$0xf]
    %v176 = vld [vmem:[#allocation6 + $0x7c] sm:$0xf]
    %v177 = vld [vmem:[%s5] sm:$0x1]
    %v179 = vperm.slane %v177, 0
    %v213 = vunpack.c.l.b16 %v145
    %v214 = vunpack.c.l.b16 %v146
    %v215 = vunpack.c.l.b16 %v147
    %v216 = vunpack.c.l.b16 %v148
    %v217 = vunpack.c.l.b16 %v149
    %v218 = vunpack.c.l.b16 %v150
    %v219 = vunpack.c.l.b16 %v151
    %v220 = vunpack.c.l.b16 %v152
    %v221 = vunpack.c.l.b16 %v153
    %v222 = vunpack.c.l.b16 %v154
    %v223 = vunpack.c.l.b16 %v155
    %v224 = vunpack.c.l.b16 %v156
    %v225 = vunpack.c.l.b16 %v157
    %v226 = vunpack.c.l.b16 %v158
    %v227 = vunpack.c.l.b16 %v159
    %v228 = vunpack.c.l.b16 %v160
    %v229 = vunpack.c.l.b16 %v161
    %v230 = vunpack.c.l.b16 %v162
    %v231 = vunpack.c.l.b16 %v163
    %v232 = vunpack.c.l.b16 %v164
    %v233 = vunpack.c.l.b16 %v165
    %v234 = vunpack.c.l.b16 %v166
    %v235 = vunpack.c.l.b16 %v167
    %v236 = vunpack.c.l.b16 %v168
    %v237 = vunpack.c.l.b16 %v169
    %v238 = vunpack.c.l.b16 %v170
    %v239 = vunpack.c.l.b16 %v171
    %v240 = vunpack.c.l.b16 %v172
    %v241 = vunpack.c.l.b16 %v173
    %v242 = vunpack.c.l.b16 %v174
    %v243 = vunpack.c.l.b16 %v175
    %v244 = vunpack.c.l.b16 %v176
    %v245 = vpack.c.b16 %v214, %v213
    %v246 = vpack.c.b16 %v216, %v215
    %v247 = vpack.c.b16 %v218, %v217
    %v248 = vpack.c.b16 %v220, %v219
    %v249 = vpack.c.b16 %v222, %v221
    %v250 = vpack.c.b16 %v224, %v223
    %v251 = vpack.c.b16 %v226, %v225
    %v252 = vpack.c.b16 %v228, %v227
    %v253 = vpack.c.b16 %v230, %v229
    %v254 = vpack.c.b16 %v232, %v231
    %v255 = vpack.c.b16 %v234, %v233
    %v256 = vpack.c.b16 %v236, %v235
    %v257 = vpack.c.b16 %v238, %v237
    %v258 = vpack.c.b16 %v240, %v239
    %v259 = vpack.c.b16 %v242, %v241
    %v260 = vpack.c.b16 %v244, %v243
    %277 = vmatpush.bf16.msra.mxu0 %v252
    %278 = vmatpush.bf16.msra.mxu0 %v251
    %279 = vmatpush.bf16.msra.mxu0 %v250
    %280 = vmatpush.bf16.msra.mxu0 %v249
    %281 = vmatpush.bf16.msra.mxu0 %v248
    %282 = vmatpush.bf16.msra.mxu0 %v247
    %283 = vmatpush.bf16.msra.mxu0 %v246
    %284 = vmatpush.bf16.msra.mxu0 %v245
    %285 = vmatmul.bf16.gmra.mxu0 %v143
    %v286 = vpop.f32.mrf.mxu0
    %v287 = vadd.f32 %v179, %v286
    %v288 = vpop.f32.mrf.mxu0
    %289 = vdwg.mxu0
    %290 = vmatpush.bf16.msra.mxu0 %v260
    %291 = vmatpush.bf16.msra.mxu0 %v259
    %292 = vmatpush.bf16.msra.mxu0 %v258
    %293 = vmatpush.bf16.msra.mxu0 %v257
    %294 = vmatpush.bf16.msra.mxu0 %v256
    %295 = vmatpush.bf16.msra.mxu0 %v255
    %296 = vmatpush.bf16.msra.mxu0 %v254
    %297 = vmatpush.bf16.msra.mxu0 %v253
    %298 = vmatmul.bf16.gmra.mxu0 %v144
    %v299 = vpop.f32.mrf.mxu0
    %v300 = vadd.f32 %v287, %v299
    %v301 = vpop.f32.mrf.mxu0
    %302 = vdwg.mxu0
    %v303 = vmax.f32 %v300, 0.0
    %v304 = vld [vmem:[%s1] sm:$0xff]
    %v305 = vpack.c.bf16 %v304, %v304
    %v306 = vld [vmem:[%s6] sm:$0x3]
    %v307 = vld [vmem:[%s7] sm:$0x1]
    %v309 = vperm.slane %v307, 0
    %vm311 = vcmask 31744
    %v313 = vsel %vm311, %v305, 0
    %vm315 = vcmask 1041408
    %v317 = vsel %vm315, %v306, 0
    %319 = vmatpush.bf16.msra.mxu0 0
    %320 = vmatpush.bf16.msra.mxu0 0
    %321 = vmatpush.bf16.msra.mxu0 0
    %322 = vmatpush.bf16.msra.mxu0 0
    %323 = vmatpush.bf16.msra.mxu0 0
    %324 = vmatpush.bf16.msra.mxu0 0
    %325 = vmatpush.bf16.msra.mxu0 0
    %326 = vmatpush.bf16.msra.mxu0 %v317
    %327 = vmatmul.bf16.gmra.mxu0 %v313
    %v328 = vpop.f32.mrf.mxu0
    %v329 = vadd.f32 %v309, %v328
    %v330 = vpop.f32.mrf.mxu0
    %331 = vdwg.mxu0
    %v332 = vmax.f32 %v329, 0.0
    %v333 = vpack.c.bf16 %v303, %v303
    %v334 = vld [vmem:[#allocation8] sm:$0xf]
    %v335 = vld [vmem:[#allocation8 + $0x4] sm:$0xf]
    %v336 = vld [vmem:[#allocation8 + $0x8] sm:$0xf]
    %v337 = vld [vmem:[#allocation8 + $0xc] sm:$0xf]
    %v338 = vld [vmem:[#allocation8 + $0x10] sm:$0xf]
    %v339 = vld [vmem:[#allocation8 + $0x14] sm:$0xf]
    %v340 = vld [vmem:[#allocation8 + $0x18] sm:$0xf]
    %v341 = vld [vmem:[#allocation8 + $0x1c] sm:$0xf]
    %v342 = vld [vmem:[#allocation8 + $0x20] sm:$0xf]
    %v343 = vld [vmem:[#allocation8 + $0x24] sm:$0xf]
    %v344 = vld [vmem:[#allocation8 + $0x28] sm:$0xf]
    %v345 = vld [vmem:[#allocation8 + $0x2c] sm:$0xf]
    %v346 = vld [vmem:[#allocation8 + $0x30] sm:$0xf]
    %v347 = vld [vmem:[#allocation8 + $0x34] sm:$0xf]
    %v348 = vld [vmem:[#allocation8 + $0x38] sm:$0xf]
    %v349 = vld [vmem:[#allocation8 + $0x3c] sm:$0xf]
    %v350 = vpack.c.bf16 %v332, %v332
    %v351 = vld [vmem:[#allocation8 + $0x40] sm:$0xf]
    %v352 = vld [vmem:[#allocation8 + $0x44] sm:$0xf]
    %v353 = vld [vmem:[#allocation8 + $0x48] sm:$0xf]
    %v354 = vld [vmem:[#allocation8 + $0x4c] sm:$0xf]
    %v355 = vld [vmem:[#allocation8 + $0x50] sm:$0xf]
    %v356 = vld [vmem:[#allocation8 + $0x54] sm:$0xf]
    %v357 = vld [vmem:[#allocation8 + $0x58] sm:$0xf]
    %v358 = vld [vmem:[#allocation8 + $0x5c] sm:$0xf]
    %v359 = vld [vmem:[#allocation8 + $0x60] sm:$0xf]
    %v360 = vld [vmem:[#allocation8 + $0x64] sm:$0xf]
    %v361 = vld [vmem:[#allocation8 + $0x68] sm:$0xf]
    %v362 = vld [vmem:[#allocation8 + $0x6c] sm:$0xf]
    %v363 = vld [vmem:[#allocation8 + $0x70] sm:$0xf]
    %v364 = vld [vmem:[#allocation8 + $0x74] sm:$0xf]
    %v365 = vld [vmem:[#allocation8 + $0x78] sm:$0xf]
    %v366 = vld [vmem:[#allocation8 + $0x7c] sm:$0xf]
    %v383 = vunpack.c.l.b16 %v351
    %v384 = vunpack.c.l.b16 %v352
    %v385 = vunpack.c.l.b16 %v353
    %v386 = vunpack.c.l.b16 %v354
    %v387 = vunpack.c.l.b16 %v355
    %v388 = vunpack.c.l.b16 %v356
    %v389 = vunpack.c.l.b16 %v357
    %v390 = vunpack.c.l.b16 %v358
    %v391 = vunpack.c.l.b16 %v359
    %v392 = vunpack.c.l.b16 %v360
    %v393 = vunpack.c.l.b16 %v361
    %v394 = vunpack.c.l.b16 %v362
    %v395 = vunpack.c.l.b16 %v363
    %v396 = vunpack.c.l.b16 %v364
    %v397 = vunpack.c.l.b16 %v365
    %v398 = vunpack.c.l.b16 %v366
    %v399 = vpack.c.b16 %v384, %v383
    %v400 = vpack.c.b16 %v386, %v385
    %v401 = vpack.c.b16 %v388, %v387
    %v402 = vpack.c.b16 %v390, %v389
    %v403 = vpack.c.b16 %v392, %v391
    %v404 = vpack.c.b16 %v394, %v393
    %v405 = vpack.c.b16 %v396, %v395
    %v406 = vpack.c.b16 %v398, %v397
    %415 = vmatpush.bf16.msra.mxu0 %v406
    %416 = vmatpush.bf16.msra.mxu0 %v405
    %417 = vmatpush.bf16.msra.mxu0 %v404
    %418 = vmatpush.bf16.msra.mxu0 %v403
    %419 = vmatpush.bf16.msra.mxu0 %v402
    %420 = vmatpush.bf16.msra.mxu0 %v401
    %421 = vmatpush.bf16.msra.mxu0 %v400
    %422 = vmatpush.bf16.msra.mxu0 %v399
    %423 = vmatmul.bf16.gmra.mxu0 %v350
    %v424 = vpop.f32.mrf.mxu0
    %v425 = vadd.f32 0.0, %v424
    %v426 = vpop.f32.mrf.mxu0
    %427 = vdwg.mxu0
    %v444 = vunpack.c.l.b16 %v334
    %v445 = vunpack.c.l.b16 %v335
    %v446 = vunpack.c.l.b16 %v336
    %v447 = vunpack.c.l.b16 %v337
    %v448 = vunpack.c.l.b16 %v338
    %v449 = vunpack.c.l.b16 %v339
    %v450 = vunpack.c.l.b16 %v340
    %v451 = vunpack.c.l.b16 %v341
    %v452 = vunpack.c.l.b16 %v342
    %v453 = vunpack.c.l.b16 %v343
    %v454 = vunpack.c.l.b16 %v344
    %v455 = vunpack.c.l.b16 %v345
    %v456 = vunpack.c.l.b16 %v346
    %v457 = vunpack.c.l.b16 %v347
    %v458 = vunpack.c.l.b16 %v348
    %v459 = vunpack.c.l.b16 %v349
    %v460 = vpack.c.b16 %v445, %v444
    %v461 = vpack.c.b16 %v447, %v446
    %v462 = vpack.c.b16 %v449, %v448
    %v463 = vpack.c.b16 %v451, %v450
    %v464 = vpack.c.b16 %v453, %v452
    %v465 = vpack.c.b16 %v455, %v454
    %v466 = vpack.c.b16 %v457, %v456
    %v467 = vpack.c.b16 %v459, %v458
    %476 = vmatpush.bf16.msra.mxu0 %v467
    %477 = vmatpush.bf16.msra.mxu0 %v466
    %478 = vmatpush.bf16.msra.mxu0 %v465
    %479 = vmatpush.bf16.msra.mxu0 %v464
    %480 = vmatpush.bf16.msra.mxu0 %v463
    %481 = vmatpush.bf16.msra.mxu0 %v462
    %482 = vmatpush.bf16.msra.mxu0 %v461
    %483 = vmatpush.bf16.msra.mxu0 %v460
    %484 = vmatmul.bf16.gmra.mxu0 %v333
    %v485 = vpop.f32.mrf.mxu0
    %v486 = vadd.f32 %v425, %v485
    %v487 = vpop.f32.mrf.mxu0
    %488 = vdwg.mxu0
    %v489 = vld [vmem:[%s9] sm:$0x1]
    %v491 = vperm.slane %v489, 0
    %v493 = vadd.f32 %v486, %v491
    %v494 = vmax.f32 %v493, 0.0
    %v495 = vld [vmem:[%s10] sm:$0x1]
    %v497 = vperm.slane %v495, 0
    %v499 = vmul.f32 %v494, %v497
    %500 = vadd.xlane.f32.xlu0 %v499
    %v501 = vpop.xlane.xlu0 %500
    %v502 = vld [vmem:[#allocation2] sm:$0x1]
    %v504 = vperm.slane %v502, 0
    %v506 = vadd.f32 %v501, %v504
    %508 = vset.pattern.permute.xlu0 0
    %509 = vperm.xlu0 %508, %v506
    %v510 = vpop.permute.xlu0 %509
    %512 = vst [vmem:[#allocation9] sm:$0xff] %v510
    // Predicated region
    $region62: #{tpu_custom_call.1} parent=1 // pred_check
      _
    $region63: #{tpu_custom_call.1} parent=1 // pred_check_branch
      %514 = sbr.rel (0) target = $region65
    $region64: #{tpu_custom_call.1} parent=1 // pred_region
      %516 = vsyncadd [#allocation5], 0
      %s518 = sshll.u32 [#allocation9], 4
      %s519 = int_to_ptr.vmem [resolvable:$true] %s518
      %s520 = sshll.u32 %s12, 4
      %s521 = int_to_ptr.hbm [resolvable:$true] %s520
      %523 = dma.vmem_to_hbm [thread:$0]  %s519, 128, %s521, [#allocation5]
    $region65: #{tpu_custom_call.1} parent=1 // pred_fallthru
      _
    // Predicated region
    $region66: #{tpu_custom_call.1} parent=1 // pred_check
      _
    $region67: #{tpu_custom_call.1} parent=1 // pred_check_branch
      %525 = sbr.rel (0) target = $region69
    $region68: #{tpu_custom_call.1} parent=1 // pred_region
      %527 = dma.done [#allocation5], 128
    $region69: #{tpu_custom_call.1} parent=1 // pred_fallthru
      _
    %528 = vsyncpa [#allocation4], 1
    %529 = vsyncpa [#allocation7], 1
    %530 = vsyncpa [#allocation5], 1

</llo_original>
